<compile_context>
chip_gen: v5e
topology: v5e:2x2
jax: 0.10.0
libtpu: 0.0.40
codegen_flags: <defaults>
</compile_context>

<pallas_src>
import math

import jax
import jax.numpy as jnp
import numpy as np
from jax.experimental import pallas as pl
from jax.experimental.pallas import tpu as pltpu


def _rope_kernel(x_ref, cos_ref, sa_ref, sb_ref, o_ref):
    # x_ref/o_ref: (tr, W) tile of the (batch-sliced) folded input/output.
    # cos_ref/sa_ref/sb_ref: (tr, W) tiles of the position tables
    # (batch-invariant -> stay resident in VMEM across the batch sweep).
    #
    # sa (= -sin, even lanes only) multiplies x[j+1]; sb (= sin, odd lanes
    # only) multiplies x[j-1]. W is even, so the roll wraparound lanes
    # (0 and W-1) are always multiplied by a zero table entry.
    x = x_ref[...].astype(jnp.float32)       # f32 accumulation even for bf16 I/O
    w = x.shape[-1]
    lane_axis = x.ndim - 1                   # pltpu.roll needs a non-negative axis
    x_next = pltpu.roll(x, w - 1, lane_axis)  # x_next[j] = x[(j + 1) % w]
    x_prev = pltpu.roll(x, 1, lane_axis)      # x_prev[j] = x[(j - 1) % w]
    out = x * cos_ref[...] + x_next * sa_ref[...] + x_prev * sb_ref[...]
    o_ref[...] = out.astype(o_ref.dtype)


def make_rope_buffers(d_model, max_len, dtype=jnp.float32):
    """Build sin_pos / cos_pos exactly like the PyTorch __init__ buffers."""
    assert d_model % 2 == 0
    position = jnp.arange(max_len, dtype=jnp.float32)[:, None]                 # (L, 1)
    div_term = jnp.exp(
        jnp.arange(0.0, d_model, 2.0, dtype=jnp.float32)
        * (-math.log(10000.0) / d_model)
    )                                                                          # (D/2,)
    ang = position * div_term                                                  # (L, D/2)
    # pe[:, 0::2]=sin, pe[:, 1::2]=cos; then repeat_interleave(2, -1):
    sin_pos = jnp.repeat(jnp.sin(ang), 2, axis=-1)                             # (L, D)
    cos_pos = jnp.repeat(jnp.cos(ang), 2, axis=-1)                             # (L, D)
    return sin_pos.astype(dtype), cos_pos.astype(dtype)


def _vmem_capacity_bytes():
    try:
        return int(pltpu.get_tpu_info().vmem_capacity_bytes)
    except Exception:
        return 64 << 20  # conservative fallback: v7x per-TensorCore VMEM


def rope_embedding_1d(x, cos_pos, sin_pos, *, donate_x=False):
    """out = x * cos_pos + rotate_every_two(x) * sin_pos, via Pallas.

    x:        (B, L, D)  float32 or bfloat16  (L == max_len, D == d_model)
    cos_pos:  (L, D)
    sin_pos:  (L, D)
    donate_x: alias x with the output (only if the caller no longer needs x).
    """
    B, L, D = x.shape
    assert D % 2 == 0
    assert cos_pos.shape == (L, D) and sin_pos.shape == (L, D)

    # ---- host-side table prep: fold sign & lane parity into the sin tables ----
    parity = jnp.arange(D, dtype=jnp.int32) % 2
    cos_t = cos_pos.astype(jnp.float32)
    sin_a = jnp.where(parity == 0, -sin_pos.astype(jnp.float32), 0.0)  # * x[j+1]
    sin_b = jnp.where(parity == 1, sin_pos.astype(jnp.float32), 0.0)   # * x[j-1]

    # ---- lane-dense fold: last dim the largest divisor of L*D that is a ------
    # multiple of 128 (capped so tiles stay reasonable). Fall back to W=D
    # (masked partial stores) only when no such divisor exists. The fold is
    # safe because D and W are even, so flat-index parity == lane parity and
    # a (2i, 2i+1) pair never straddles a row boundary.
    flat = L * D
    W = D
    start = (min(4096, flat) // 128) * 128
    for cand in range(start, 127, -128):
        if flat % cand == 0:
            W = cand
            break
    assert W % 2 == 0, "lane fold must preserve even/odd pairing"
    R = flat // W

    x3 = x.reshape(B, R, W)
    cos_t = cos_t.reshape(R, W)
    sin_a = sin_a.reshape(R, W)
    sin_b = sin_b.reshape(R, W)

    # ---- generation-aware tile sizing -----------------------------------------
    itemsize = jnp.dtype(x.dtype).itemsize
    sub = 8 * max(1, 4 // itemsize)          # sublane multiple: 8 f32, 16 bf16
    vmem_cap = _vmem_capacity_bytes()
    n_streams = 5                            # x, cos, sin_a, sin_b, out
    pipeline_budget = min(vmem_cap // 2, 48 << 20)   # total double-buffered footprint
    per_buffer_bytes = pipeline_budget // (2 * n_streams)
    max_block_elems = max(sub * W, per_buffer_bytes // 4)  # f32 worst case per buffer

    if R * W <= max_block_elems:
        tr = R
    else:
        tr = max(sub, (max_block_elems // W) // sub * sub)
        tr = min(tr, R)

    # Ensure enough grid steps for pipeline overlap and v7x dual-TC sharding.
    min_steps = 4
    while pl.cdiv(R, tr) * B < min_steps and tr >= 2 * sub:
        tr = max(sub, (tr // 2) // sub * sub)

    # Batch is the innermost grid axis so the cos/sin blocks (index ignores b)
    # stay resident in VMEM across the whole batch sweep. If R % tr != 0 the
    # last block relies on Pallas padding + masked writeback -- fine for this
    # purely elementwise kernel (rolls never cross rows).
    grid = (pl.cdiv(R, tr), B)

    cost = pl.CostEstimate(
        flops=6 * B * L * D,
        transcendentals=0,
        bytes_accessed=itemsize * 2 * B * L * D + 4 * 3 * L * D,
    )

    extra = {}
    if donate_x:
        extra["input_output_aliases"] = {0: 0}

    out = pl.pallas_call(
        _rope_kernel,
        out_shape=jax.ShapeDtypeStruct((B, R, W), x.dtype),
        grid_spec=pltpu.PrefetchScalarGridSpec(
            num_scalar_prefetch=0,
            grid=grid,
            in_specs=[
                pl.BlockSpec((None, tr, W), lambda r, b: (b, r, 0)),
                pl.BlockSpec((tr, W), lambda r, b: (r, 0)),
                pl.BlockSpec((tr, W), lambda r, b: (r, 0)),
                pl.BlockSpec((tr, W), lambda r, b: (r, 0)),
            ],
            out_specs=pl.BlockSpec((None, tr, W), lambda r, b: (b, r, 0)),
        ),
        compiler_params=pltpu.CompilerParams(
            dimension_semantics=("parallel", "parallel"),
            vmem_limit_bytes=min(vmem_cap * 3 // 4, 96 << 20),
        ),
        cost_estimate=cost,
        **extra,
    )(x3, cos_t, sin_a, sin_b)

    return out.reshape(B, L, D)


if __name__ == "__main__":
    # Small shapes consistent with the module: batch=2, max_len=16, d_model=32.
    B, L, D = 2, 16, 32

    key = jax.random.PRNGKey(0)
    x = jax.random.normal(key, (B, L, D), dtype=jnp.float32)

    sin_pos, cos_pos = make_rope_buffers(D, L)

    out = jax.block_until_ready(rope_embedding_1d(x, cos_pos, sin_pos))

    # Pure-JAX reference mirroring the PyTorch forward exactly.
    x2 = jnp.stack([-x[..., 1::2], x[..., 0::2]], axis=-1).reshape(x.shape)
    ref = x * cos_pos[None] + x2 * sin_pos[None]

    assert out.shape == (B, L, D), out.shape
    np.testing.assert_allclose(np.asarray(out), np.asarray(ref), rtol=1e-5, atol=1e-5)
    print("KERNEL_OK")
</pallas_src>

<mosaic_0001>
module attributes {stable_mosaic.version = 11 : i64} {
  func.func @_rope_kernel(%arg0: i32, %arg1: i32, %arg2: memref<1x1x512xf32, #tpu.memory_space<vmem>>, %arg3: memref<1x512xf32, #tpu.memory_space<vmem>>, %arg4: memref<1x512xf32, #tpu.memory_space<vmem>>, %arg5: memref<1x512xf32, #tpu.memory_space<vmem>>, %arg6: memref<1x1x512xf32, #tpu.memory_space<vmem>>) attributes {dimension_semantics = [#tpu.dimension_semantics<parallel>, #tpu.dimension_semantics<parallel>], iteration_bounds = array<i64: 1, 2>, scalar_prefetch = 0 : i64, scratch_operands = 0 : i64, tpu.core_type = #tpu.core_type<tc>, window_params = [{transform_indices = @transform_0, window_bounds = array<i64: 1, 1, 512>}, {transform_indices = @transform_1, window_bounds = array<i64: 1, 512>}, {transform_indices = @transform_2, window_bounds = array<i64: 1, 512>}, {transform_indices = @transform_3, window_bounds = array<i64: 1, 512>}, {transform_indices = @transform_4, window_bounds = array<i64: 1, 1, 512>}]} {
    %c0 = arith.constant 0 : index
    %c0_0 = arith.constant 0 : index
    %c0_1 = arith.constant 0 : index
    %0 = vector.load %arg2[%c0, %c0_0, %c0_1] : memref<1x1x512xf32, #tpu.memory_space<vmem>>, vector<1x1x512xf32>
    %1 = vector.shape_cast %0 : vector<1x1x512xf32> to vector<1x512xf32>
    %c511_i32 = arith.constant 511 : i32
    %2 = tpu.dynamic_rotate %1 by %c511_i32 dim 1 : vector<1x512xf32>, i32 -> vector<1x512xf32>
    %c1_i32 = arith.constant 1 : i32
    %3 = tpu.dynamic_rotate %1 by %c1_i32 dim 1 : vector<1x512xf32>, i32 -> vector<1x512xf32>
    %c0_2 = arith.constant 0 : index
    %c0_3 = arith.constant 0 : index
    %4 = vector.load %arg3[%c0_2, %c0_3] : memref<1x512xf32, #tpu.memory_space<vmem>>, vector<1x512xf32>
    %5 = arith.mulf %1, %4 : vector<1x512xf32>
    %c0_4 = arith.constant 0 : index
    %c0_5 = arith.constant 0 : index
    %6 = vector.load %arg4[%c0_4, %c0_5] : memref<1x512xf32, #tpu.memory_space<vmem>>, vector<1x512xf32>
    %7 = arith.mulf %2, %6 : vector<1x512xf32>
    %8 = arith.addf %5, %7 : vector<1x512xf32>
    %c0_6 = arith.constant 0 : index
    %c0_7 = arith.constant 0 : index
    %9 = vector.load %arg5[%c0_6, %c0_7] : memref<1x512xf32, #tpu.memory_space<vmem>>, vector<1x512xf32>
    %10 = arith.mulf %3, %9 : vector<1x512xf32>
    %11 = arith.addf %8, %10 : vector<1x512xf32>
    %c0_8 = arith.constant 0 : index
    %c0_9 = arith.constant 0 : index
    %c0_10 = arith.constant 0 : index
    %12 = vector.load %arg6[%c0_8, %c0_9, %c0_10] : memref<1x1x512xf32, #tpu.memory_space<vmem>>, vector<1x1x512xf32>
    %13 = vector.shape_cast %12 : vector<1x1x512xf32> to vector<1x512xf32>
    %14 = vector.shape_cast %11 : vector<1x512xf32> to vector<1x1x512xf32>
    tpu.vector_store %arg6[%c0_8, %c0_9, %c0_10], %14 {strides = array<i32>} : memref<1x1x512xf32, #tpu.memory_space<vmem>>, vector<1x1x512xf32>,
    return
  }
  func.func @transform_0(%arg0: i32, %arg1: i32) -> (i32, i32, i32) {
    %c0_i32 = arith.constant 0 : i32
    %c0_i32_0 = arith.constant 0 : i32
    return %arg1, %arg0, %c0_i32 : i32, i32, i32
  }
  func.func @transform_1(%arg0: i32, %arg1: i32) -> (i32, i32) {
    %c0_i32 = arith.constant 0 : i32
    %c0_i32_0 = arith.constant 0 : i32
    return %arg0, %c0_i32 : i32, i32
  }
  func.func @transform_2(%arg0: i32, %arg1: i32) -> (i32, i32) {
    %c0_i32 = arith.constant 0 : i32
    %c0_i32_0 = arith.constant 0 : i32
    return %arg0, %c0_i32 : i32, i32
  }
  func.func @transform_3(%arg0: i32, %arg1: i32) -> (i32, i32) {
    %c0_i32 = arith.constant 0 : i32
    %c0_i32_0 = arith.constant 0 : i32
    return %arg0, %c0_i32 : i32, i32
  }
  func.func @transform_4(%arg0: i32, %arg1: i32) -> (i32, i32, i32) {
    %c0_i32 = arith.constant 0 : i32
    %c0_i32_0 = arith.constant 0 : i32
    return %arg1, %arg0, %c0_i32 : i32, i32, i32
  }
}

</mosaic_0001>

<llo_original>
// kernel: tpu_custom_call.1
$region0: #{tpu_custom_call.1}
  #allocation0 [shape = 'u32[]', space=smem, size = 0x4, offset = 0x4, fixed_abs, tag = 'smem constant byte address 0x4 - core index']
  #allocation1 [shape = 'u32[72,128]{1,0:T(1,128)}', space=vmem, size = 0x9000, scoped, tag = 'internal scratch']
  %s0 = inlined_call_operand.hbm [shape: f32[2,1,512], index: 0, kind: input, shape index: {}]
  %s1 = inlined_call_operand.hbm [shape: f32[1,512], index: 1, kind: input, shape index: {}]
  %s2 = inlined_call_operand.hbm [shape: f32[1,512], index: 2, kind: input, shape index: {}]
  %s3 = inlined_call_operand.hbm [shape: f32[1,512], index: 3, kind: input, shape index: {}]
  %s4 = inlined_call_operand.hbm [shape: f32[2,1,512], index: 4, kind: output, shape index: {}]
  %s5 = sld [smem:[#allocation0]]
  $region65: #{tpu_custom_call.1} parent=0
    _
  %s7 = ssub.s32 1, %s5
  %s8 = scalar_select 0, %s7, %s5
  $region1: #{tpu_custom_call.1} parent=0
    #allocation2 [shape = 'u8[4096]{0}', space=vmem, size = 0x1000, scoped, tag = 'input window, operand 0']
    #allocation3 [shape = 's32[2]{0}', space=sflag, size = 0x8, scoped, tag = 'scoped memory for tpu_custom_call.1']
    #allocation4 [shape = 's32[2]{0}', space=sflag, size = 0x8, scoped, tag = 'scoped memory for tpu_custom_call.1']
    #allocation5 [shape = 'u8[2048]{0}', space=vmem, size = 0x800, scoped, tag = 'input window, operand 1, single buffered']
    #allocation6 [shape = 's32[1]{0}', space=sflag, size = 0x4, scoped, tag = 'scoped memory for tpu_custom_call.1']
    #allocation7 [shape = 'u8[2048]{0}', space=vmem, size = 0x800, scoped, tag = 'input window, operand 2, single buffered']
    #allocation8 [shape = 'u8[2048]{0}', space=vmem, size = 0x800, scoped, tag = 'input window, operand 3, single buffered']
    #allocation9 [shape = 's32[1]{0}', space=sflag, size = 0x4, scoped, tag = 'scoped memory for tpu_custom_call.1']
    #allocation10 [shape = 'u8[4096]{0}', space=vmem, size = 0x1000, scoped, tag = 'output window, operand 0']
    %9 = vsyncpa [#allocation3], 0
    %s10 = scalar_lea.sflag [#allocation3], 1
    %11 = vsyncpa %s10, 0
    %12 = vsyncpa [#allocation6], 0
    %13 = vsyncpa [#allocation9], 0
    %14 = vsyncpa [#allocation4], 0
    %s15 = scalar_lea.sflag [#allocation4], 1
    %16 = vsyncpa %s15, 0
    loop: start=0, step=1, limit=4
    $region2: #{tpu_custom_call.1} parent=1 // loop_pre_header
      _
    $region3: #{tpu_custom_call.1} parent=1 // loop_header
      %s18 = sphi 0, %s22
      %p19 = scmp.ge.s32.totalorder %s18, 4
      %s25 = sphi 0, %s37
      %s26 = sphi 0, %s33
      %s27 = sphi 0, %s25
      %s28 = sphi 0, %s26
      %s29 = sphi 0, %s27
      %s30 = sphi 0, %s28
      %s42 = sphi 0, %s44
      %s45 = sphi 0, %s42
      %s46 = sphi 0, %s45
      %s62 = sphi 0, %s46
      %s68 = sphi 0, %s70
      %s71 = sphi 0, %s68
      %s72 = sphi 0, %s71
      %s88 = sphi 0, %s72
      %s94 = sphi 0, %s96
      %s97 = sphi 0, %s94
      %s98 = sphi 0, %s97
      %s114 = sphi 0, %s98
      %s120 = sphi 0, %s122
      %s123 = sphi 0, %s120
      %s124 = sphi 0, %s123
      %s140 = sphi 0, %s124
      %s148 = sphi 0, %s150
      %s151 = sphi 0, %s148
      %s152 = sphi 0, %s151
      %s168 = sphi 0, %s152
    $region4: #{tpu_custom_call.1} parent=1 // loop_header_branch
      %21 = sbr.rel (%p19) target = $region8
    $region5: #{tpu_custom_call.1} parent=1 // loop_body
      %s23 = ssub.s32 %s18, 1
      %s24 = ssub.s32 %s18, 2
      %s31 = sadd.s32 1, %s26
      %p32 = scmp.ge.s32.totalorder %s31, 2
      %s33 = scalar_select %p32, 0, %s31
      %s34 = sadd.s32 1, %s25
      %s35 = scalar_select %p32, %s34, %s25
      %p36 = scmp.ge.s32.totalorder %s35, 1
      %s37 = scalar_select %p36, 0, %s35
      %s38 = ssub.s32 %s26, %s33
      %s39 = ssub.s32 %s25, %s37
      %s40 = sor.u32 %s38, %s39
      %p41 = scmp.eq.s32.totalorder %s40, 0
      %s43 = sadd.s32 %s42, 1
      %s44 = scalar_select %p41, %s42, %s43
      %p47 = pneg %p41
      %p48 = scmp.eq.s32.totalorder %s18, 1
      %p49 = por %p47, %p48
      %p50 = scmp.ne.s32.totalorder %s42, %s45
      %p51 = scmp.eq.s32.totalorder %s18, 0
      %p52 = por %p50, %p51
      %p53 = scmp.ne.s32.totalorder %s42, %s45
      %p54 = scmp.eq.s32.totalorder %s23, 1
      %p55 = por %p53, %p54
      %p56 = scmp.ne.s32.totalorder %s45, %s46
      %p57 = scmp.eq.s32.totalorder %s23, 0
      %p58 = por %p56, %p57
      %p59 = scmp.ne.s32.totalorder %s45, %s46
      %p60 = scmp.eq.s32.totalorder %s24, 1
      %p61 = por %p59, %p60
      %p63 = scmp.ne.s32.totalorder %s46, %s62
      %p64 = scmp.eq.s32.totalorder %s24, 0
      %p65 = por %p63, %p64
      %s66 = ssub.s32 %s25, %s37
      %p67 = scmp.eq.s32.totalorder %s66, 0
      %s69 = sadd.s32 %s68, 1
      %s70 = scalar_select %p67, %s68, %s69
      %p73 = pneg %p67
      %p74 = scmp.eq.s32.totalorder %s18, 1
      %p75 = por %p73, %p74
      %p76 = scmp.ne.s32.totalorder %s68, %s71
      %p77 = scmp.eq.s32.totalorder %s18, 0
      %p78 = por %p76, %p77
      %p79 = scmp.ne.s32.totalorder %s68, %s71
      %p80 = scmp.eq.s32.totalorder %s23, 1
      %p81 = por %p79, %p80
      %p82 = scmp.ne.s32.totalorder %s71, %s72
      %p83 = scmp.eq.s32.totalorder %s23, 0
      %p84 = por %p82, %p83
      %p85 = scmp.ne.s32.totalorder %s71, %s72
      %p86 = scmp.eq.s32.totalorder %s24, 1
      %p87 = por %p85, %p86
      %p89 = scmp.ne.s32.totalorder %s72, %s88
      %p90 = scmp.eq.s32.totalorder %s24, 0
      %p91 = por %p89, %p90
      %s92 = ssub.s32 %s25, %s37
      %p93 = scmp.eq.s32.totalorder %s92, 0
      %s95 = sadd.s32 %s94, 1
      %s96 = scalar_select %p93, %s94, %s95
      %p99 = pneg %p93
      %p100 = scmp.eq.s32.totalorder %s18, 1
      %p101 = por %p99, %p100
      %p102 = scmp.ne.s32.totalorder %s94, %s97
      %p103 = scmp.eq.s32.totalorder %s18, 0
      %p104 = por %p102, %p103
      %p105 = scmp.ne.s32.totalorder %s94, %s97
      %p106 = scmp.eq.s32.totalorder %s23, 1
      %p107 = por %p105, %p106
      %p108 = scmp.ne.s32.totalorder %s97, %s98
      %p109 = scmp.eq.s32.totalorder %s23, 0
      %p110 = por %p108, %p109
      %p111 = scmp.ne.s32.totalorder %s97, %s98
      %p112 = scmp.eq.s32.totalorder %s24, 1
      %p113 = por %p111, %p112
      %p115 = scmp.ne.s32.totalorder %s98, %s114
      %p116 = scmp.eq.s32.totalorder %s24, 0
      %p117 = por %p115, %p116
      %s118 = ssub.s32 %s25, %s37
      %p119 = scmp.eq.s32.totalorder %s118, 0
      %s121 = sadd.s32 %s120, 1
      %s122 = scalar_select %p119, %s120, %s121
      %p125 = pneg %p119
      %p126 = scmp.eq.s32.totalorder %s18, 1
      %p127 = por %p125, %p126
      %p128 = scmp.ne.s32.totalorder %s120, %s123
      %p129 = scmp.eq.s32.totalorder %s18, 0
      %p130 = por %p128, %p129
      %p131 = scmp.ne.s32.totalorder %s120, %s123
      %p132 = scmp.eq.s32.totalorder %s23, 1
      %p133 = por %p131, %p132
      %p134 = scmp.ne.s32.totalorder %s123, %s124
      %p135 = scmp.eq.s32.totalorder %s23, 0
      %p136 = por %p134, %p135
      %p137 = scmp.ne.s32.totalorder %s123, %s124
      %p138 = scmp.eq.s32.totalorder %s24, 1
      %p139 = por %p137, %p138
      %p141 = scmp.ne.s32.totalorder %s124, %s140
      %p142 = scmp.eq.s32.totalorder %s24, 0
      %p143 = por %p141, %p142
      %s144 = ssub.s32 %s26, %s33
      %s145 = ssub.s32 %s25, %s37
      %s146 = sor.u32 %s144, %s145
      %p147 = scmp.eq.s32.totalorder %s146, 0
      %s149 = sadd.s32 %s148, 1
      %s150 = scalar_select %p147, %s148, %s149
      %p153 = pneg %p147
      %p154 = scmp.eq.s32.totalorder %s18, 1
      %p155 = por %p153, %p154
      %p156 = scmp.ne.s32.totalorder %s148, %s151
      %p157 = scmp.eq.s32.totalorder %s18, 0
      %p158 = por %p156, %p157
      %p159 = scmp.ne.s32.totalorder %s148, %s151
      %p160 = scmp.eq.s32.totalorder %s23, 1
      %p161 = por %p159, %p160
      %p162 = scmp.ne.s32.totalorder %s151, %s152
      %p163 = scmp.eq.s32.totalorder %s23, 0
      %p164 = por %p162, %p163
      %p165 = scmp.ne.s32.totalorder %s151, %s152
      %p166 = scmp.eq.s32.totalorder %s24, 1
      %p167 = por %p165, %p166
      %p169 = scmp.ne.s32.totalorder %s152, %s168
      %p170 = scmp.eq.s32.totalorder %s24, 0
      %p171 = por %p169, %p170
      %p172 = scmp.le.s32.totalorder 1, %s18
      %p173 = scmp.lt.s32.totalorder %s18, 3
      %p174 = pnand %p172, %p173
      %p175 = pneg %p174
      // Predicated region
      $region9: #{tpu_custom_call.1} parent=5 // pred_check
        _
      $region10: #{tpu_custom_call.1} parent=5 // pred_check_branch
        %177 = sbr.rel (%p174) target = $region12
      $region11: #{tpu_custom_call.1} parent=5 // pred_region
        %s178 = ssub.s32 %s18, 1
        // Predicated region
        $region13: #{tpu_custom_call.1} parent=11 // pred_check
          %p179 = pneg %p84
        $region14: #{tpu_custom_call.1} parent=11 // pred_check_branch
          %181 = sbr.rel (%p179) target = $region16
        $region15: #{tpu_custom_call.1} parent=11 // pred_region
          %183 = vsyncadd [#allocation6], 0
          %s184 = smul.addr %s27, 4
          %s185 = scalar_lea.hbm %s1, %s184
          %s187 = sshll.u32 %s185, 4
          %s188 = int_to_ptr.hbm [resolvable:$true] %s187
          %s189 = sshll.u32 [#allocation5], 4
          %s190 = int_to_ptr.vmem [resolvable:$true] %s189
          %192 = dma.hbm_to_vmem [thread:$0]  %s188, 64, %s190, [#allocation6]
        $region16: #{tpu_custom_call.1} parent=11 // pred_fallthru
          _
        // Predicated region
        $region17: #{tpu_custom_call.1} parent=11 // pred_check
          %p193 = pneg %p110
        $region18: #{tpu_custom_call.1} parent=11 // pred_check_branch
          %195 = sbr.rel (%p193) target = $region20
        $region19: #{tpu_custom_call.1} parent=11 // pred_region
          %197 = vsyncadd [#allocation6], 0
          %s198 = smul.addr %s27, 4
          %s199 = scalar_lea.hbm %s2, %s198
          %s201 = sshll.u32 %s199, 4
          %s202 = int_to_ptr.hbm [resolvable:$true] %s201
          %s203 = sshll.u32 [#allocation7], 4
          %s204 = int_to_ptr.vmem [resolvable:$true] %s203
          %206 = dma.hbm_to_vmem [thread:$0]  %s202, 64, %s204, [#allocation6]
        $region20: #{tpu_custom_call.1} parent=11 // pred_fallthru
          _
        // Predicated region
        $region21: #{tpu_custom_call.1} parent=11 // pred_check
          %p207 = pneg %p136
        $region22: #{tpu_custom_call.1} parent=11 // pred_check_branch
          %209 = sbr.rel (%p207) target = $region24
        $region23: #{tpu_custom_call.1} parent=11 // pred_region
          %211 = vsyncadd [#allocation9], 0
          %s212 = smul.addr %s27, 4
          %s213 = scalar_lea.hbm %s3, %s212
          %s215 = sshll.u32 %s213, 4
          %s216 = int_to_ptr.hbm [resolvable:$true] %s215
          %s217 = sshll.u32 [#allocation8], 4
          %s218 = int_to_ptr.vmem [resolvable:$true] %s217
          %220 = dma.hbm_to_vmem [thread:$0]  %s216, 64, %s218, [#allocation9]
        $region24: #{tpu_custom_call.1} parent=11 // pred_fallthru
          _
      $region12: #{tpu_custom_call.1} parent=5 // pred_fallthru
        _
      %p221 = scmp.lt.s32.totalorder %s18, 2
      // Predicated region
      $region25: #{tpu_custom_call.1} parent=5 // pred_check
        %p222 = pneg %p221
      $region26: #{tpu_custom_call.1} parent=5 // pred_check_branch
        %224 = sbr.rel (%p222) target = $region28
      $region27: #{tpu_custom_call.1} parent=5 // pred_region
        // Predicated region
        $region29: #{tpu_custom_call.1} parent=27 // pred_check
          %p225 = pneg %p52
        $region30: #{tpu_custom_call.1} parent=27 // pred_check_branch
          %227 = sbr.rel (%p225) target = $region32
        $region31: #{tpu_custom_call.1} parent=27 // pred_region
          %s228 = sand.u32 %s42, 1
          %s229 = scalar_lea.sflag [#allocation3], %s228
          %s230 = sand.u32 %s42, 1
          %s231 = smul.addr %s230, 4
          %s232 = scalar_lea.vmem [#allocation2], %s231
          %234 = vsyncadd %s229, 0
          %s235 = smul.addr %s25, 4
          %s236 = smul.addr %s26, 4
          %s237 = sadd.s32 %s235, %s236
          %s238 = scalar_lea.hbm %s0, %s237
          %s240 = sshll.u32 %s238, 4
          %s241 = int_to_ptr.hbm [resolvable:$true] %s240
          %s242 = sshll.u32 %s232, 4
          %s243 = int_to_ptr.vmem [resolvable:$true] %s242
          %245 = dma.hbm_to_vmem [thread:$0]  %s241, 64, %s243, %s229
        $region32: #{tpu_custom_call.1} parent=27 // pred_fallthru
          _
      $region28: #{tpu_custom_call.1} parent=5 // pred_fallthru
        _
      %p246 = scmp.le.s32.totalorder 1, %s18
      %p247 = scmp.lt.s32.totalorder %s18, 3
      %p248 = pnand %p246, %p247
      %p249 = pneg %p248
      // Predicated region
      $region33: #{tpu_custom_call.1} parent=5 // pred_check
        _
      $region34: #{tpu_custom_call.1} parent=5 // pred_check_branch
        %251 = sbr.rel (%p248) target = $region36
      $region35: #{tpu_custom_call.1} parent=5 // pred_region
        %s252 = ssub.s32 %s18, 1
        %s253 = sand.u32 %s45, 1
        %s254 = scalar_lea.sflag [#allocation3], %s253
        %s255 = sand.u32 %s45, 1
        %s256 = smul.addr %s255, 4
        %s257 = scalar_lea.vmem [#allocation2], %s256
        // Predicated region
        $region37: #{tpu_custom_call.1} parent=35 // pred_check
          %p258 = pneg %p58
        $region38: #{tpu_custom_call.1} parent=35 // pred_check_branch
          %260 = sbr.rel (%p258) target = $region40
        $region39: #{tpu_custom_call.1} parent=35 // pred_region
          %262 = dma.done %s254, 64
        $region40: #{tpu_custom_call.1} parent=35 // pred_fallthru
          _
        // Predicated region
        $region41: #{tpu_custom_call.1} parent=35 // pred_check
          %p263 = pneg %p84
        $region42: #{tpu_custom_call.1} parent=35 // pred_check_branch
          %265 = sbr.rel (%p263) target = $region44
        $region43: #{tpu_custom_call.1} parent=35 // pred_region
          %267 = dma.done [#allocation6], 64
        $region44: #{tpu_custom_call.1} parent=35 // pred_fallthru
          _
        // Predicated region
        $region45: #{tpu_custom_call.1} parent=35 // pred_check
          %p268 = pneg %p110
        $region46: #{tpu_custom_call.1} parent=35 // pred_check_branch
          %270 = sbr.rel (%p268) target = $region48
        $region47: #{tpu_custom_call.1} parent=35 // pred_region
          %272 = dma.done [#allocation6], 64
        $region48: #{tpu_custom_call.1} parent=35 // pred_fallthru
          _
        // Predicated region
        $region49: #{tpu_custom_call.1} parent=35 // pred_check
          %p273 = pneg %p136
        $region50: #{tpu_custom_call.1} parent=35 // pred_check_branch
          %275 = sbr.rel (%p273) target = $region52
        $region51: #{tpu_custom_call.1} parent=35 // pred_region
          %277 = dma.done [#allocation9], 64
        $region52: #{tpu_custom_call.1} parent=35 // pred_fallthru
          _
        %s278 = sand.u32 %s45, 1
        %s279 = scalar_lea.sflag [#allocation3], %s278
        %s280 = sand.u32 %s45, 1
        %s281 = smul.addr %s280, 4
        %s282 = scalar_lea.vmem [#allocation2], %s281
        %p283 = pneg %p58
        %p284 = pneg %p55
        %p285 = pneg %p84
        %p286 = pneg %p81
        %p287 = pneg %p110
        %p288 = pneg %p107
        %p289 = pneg %p136
        %p290 = pneg %p133
        %p291 = pneg %p164
        %p292 = pneg %p161
        %s293 = sand.u32 %s151, 1
        %s294 = scalar_lea.sflag [#allocation4], %s293
        %s295 = sand.u32 %s151, 1
        %s296 = smul.addr %s295, 4
        %s297 = scalar_lea.vmem [#allocation10], %s296
        %v298 = vld [vmem:[%s257] sm:$0xf]
        %v300 = vperm.slane %v298, 0
        %v301 = vperm.slane %v298, 1
        %v302 = vperm.slane %v298, 2
        %v303 = vperm.slane %v298, 3
        %308 = vrot.lane.b32.xlu0 %v300, 127
        %v309 = vpop.permute.xlu0 %308
        %310 = vrot.lane.b32.xlu0 %v301, 127
        %v311 = vpop.permute.xlu0 %310
        %312 = vrot.lane.b32.xlu0 %v302, 127
        %v313 = vpop.permute.xlu0 %312
        %314 = vrot.lane.b32.xlu0 %v303, 127
        %v315 = vpop.permute.xlu0 %314
        %v316 = vlaneseq
        %v317 = vand.u32 %v316, 127
        %vm318 = vcmp.lt.s32.totalorder %v317, 127
        %v319 = vsel %vm318, %v313, %v315
        %v320 = vsel %vm318, %v311, %v313
        %v321 = vsel %vm318, %v309, %v311
        %v322 = vsel %vm318, %v315, %v309
        %323 = vrot.lane.b32.xlu0 %v300, 1
        %v324 = vpop.permute.xlu0 %323
        %325 = vrot.lane.b32.xlu0 %v301, 1
        %v326 = vpop.permute.xlu0 %325
        %327 = vrot.lane.b32.xlu0 %v302, 1
        %v328 = vpop.permute.xlu0 %327
        %329 = vrot.lane.b32.xlu0 %v303, 1
        %v330 = vpop.permute.xlu0 %329
        %vm331 = vcmp.lt.s32.totalorder %v317, 1
        %v332 = vsel %vm331, %v328, %v330
        %v333 = vsel %vm331, %v326, %v328
        %v334 = vsel %vm331, %v324, %v326
        %v335 = vsel %vm331, %v330, %v324
        %v336 = vld [vmem:[#allocation5] sm:$0xf]
        %v337 = vmul.f32 %v298, %v336
        %v338 = vld [vmem:[#allocation7] sm:$0xf]
        %v340 = vperm.slane %v338, 0
        %v341 = vperm.slane %v338, 1
        %v342 = vperm.slane %v338, 2
        %v343 = vperm.slane %v338, 3
        %v348 = vmul.f32 %v321, %v340
        %v349 = vmul.f32 %v320, %v341
        %v350 = vmul.f32 %v319, %v342
        %v351 = vmul.f32 %v322, %v343
        %v356 = vrot.slane %v349, 7
        %v357 = vrot.slane %v350, 6
        %v358 = vrot.slane %v351, 5
        %vm359 = vcmask 1040384
        %v360 = vsel %vm359, %v348, %v356
        %vm361 = vcmask 1042434
        %v362 = vsel %vm361, %v357, %v358
        %vm363 = vcmask 1041408
        %v364 = vsel %vm363, %v360, %v362
        %v366 = vadd.f32 %v337, %v364
        %v367 = vld [vmem:[#allocation8] sm:$0xf]
        %v369 = vperm.slane %v367, 0
        %v370 = vperm.slane %v367, 1
        %v371 = vperm.slane %v367, 2
        %v372 = vperm.slane %v367, 3
        %v377 = vmul.f32 %v335, %v369
        %v378 = vmul.f32 %v334, %v370
        %v379 = vmul.f32 %v333, %v371
        %v380 = vmul.f32 %v332, %v372
        %v385 = vrot.slane %v378, 7
        %v386 = vrot.slane %v379, 6
        %v387 = vrot.slane %v380, 5
        %v388 = vsel %vm359, %v377, %v385
        %v389 = vsel %vm361, %v386, %v387
        %v390 = vsel %vm363, %v388, %v389
        %v392 = vadd.f32 %v366, %v390
        %v393 = vlaneseq
        %vm394 = vcmp.ge.s32.totalorder %v393, 0
        %vm395 = vcmp.lt.s32.totalorder %v393, 512
        %vm396 = vmand %vm394, %vm395
        %397 = vst.msk [vmem:[%s297] sm:$0xf] %vm396, %v392
        %s398 = sand.u32 %s151, 1
        %s399 = scalar_lea.sflag [#allocation4], %s398
        %s400 = sand.u32 %s151, 1
        %s401 = smul.addr %s400, 4
        %s402 = scalar_lea.vmem [#allocation10], %s401
        // Predicated region
        $region53: #{tpu_custom_call.1} parent=35 // pred_check
          %p403 = pneg %p161
        $region54: #{tpu_custom_call.1} parent=35 // pred_check_branch
          %405 = sbr.rel (%p403) target = $region56
        $region55: #{tpu_custom_call.1} parent=35 // pred_region
          %407 = vsyncadd %s399, 0
          %s408 = smul.addr %s27, 4
          %s409 = smul.addr %s28, 4
          %s410 = sadd.s32 %s408, %s409
          %s411 = scalar_lea.hbm %s4, %s410
          %s413 = sshll.u32 %s402, 4
          %s414 = int_to_ptr.vmem [resolvable:$true] %s413
          %s415 = sshll.u32 %s411, 4
          %s416 = int_to_ptr.hbm [resolvable:$true] %s415
          %418 = dma.vmem_to_hbm [thread:$0]  %s414, 64, %s416, %s399
        $region56: #{tpu_custom_call.1} parent=35 // pred_fallthru
          _
      $region36: #{tpu_custom_call.1} parent=5 // pred_fallthru
        _
      %p419 = scmp.le.s32.totalorder 2, %s18
      // Predicated region
      $region57: #{tpu_custom_call.1} parent=5 // pred_check
        %p420 = pneg %p419
      $region58: #{tpu_custom_call.1} parent=5 // pred_check_branch
        %422 = sbr.rel (%p420) target = $region60
      $region59: #{tpu_custom_call.1} parent=5 // pred_region
        %s423 = ssub.s32 %s18, 2
        // Predicated region
        $region61: #{tpu_custom_call.1} parent=59 // pred_check
          %p424 = pneg %p167
        $region62: #{tpu_custom_call.1} parent=59 // pred_check_branch
          %426 = sbr.rel (%p424) target = $region64
        $region63: #{tpu_custom_call.1} parent=59 // pred_region
          %s427 = sand.u32 %s152, 1
          %s428 = scalar_lea.sflag [#allocation4], %s427
          %s429 = sand.u32 %s152, 1
          %s430 = smul.addr %s429, 4
          %s431 = scalar_lea.vmem [#allocation10], %s430
          %433 = dma.done %s428, 64
        $region64: #{tpu_custom_call.1} parent=59 // pred_fallthru
          _
      $region60: #{tpu_custom_call.1} parent=5 // pred_fallthru
        _
    $region6: #{tpu_custom_call.1} parent=1 // loop_footer
      %s22 = sadd.s32 1, %s18
    $region7: #{tpu_custom_call.1} parent=1 // loop_footer_branch
      %17 = sbr.rel target = $region3
    $region8: #{tpu_custom_call.1} parent=1 // loop_exit
      _
    %434 = vsyncpa [#allocation3], 1
    %s435 = scalar_lea.sflag [#allocation3], 1
    %436 = vsyncpa %s435, 1
    %437 = vsyncpa [#allocation6], 1
    %438 = vsyncpa [#allocation9], 1
    %439 = vsyncpa [#allocation4], 1
    %s440 = scalar_lea.sflag [#allocation4], 1
    %441 = vsyncpa %s440, 1

</llo_original>
